<compile_context>
chip_gen: v7x
topology: tpu7x:2x2x1
jax: 0.10.0
libtpu: 0.0.40
codegen_flags: <defaults>
</compile_context>

<pallas_src>
import functools

import jax
import jax.numpy as jnp
from jax import lax
from jax.experimental import pallas as pl
from jax.experimental.pallas import tpu as pltpu


def _entropy_tile(x_ref, C, unroll):
    """Per-position softmax entropy of an (Bb, C, R, L) tile -> (Bb, 1, R, L) f32."""

    def chan(ci):
        return x_ref[:, pl.ds(ci, 1), :, :].astype(jnp.float32)   # (Bb, 1, R, L)

    if unroll:
        # Small C: fully unrolled, every op is a dense per-position vreg op.
        m = chan(0)
        for ci in range(1, C):
            m = jnp.maximum(m, chan(ci))
        z = jnp.zeros_like(m)
        w = jnp.zeros_like(m)
        for ci in range(C):
            s = chan(ci) - m
            e = jnp.exp(s)
            z = z + e
            w = w + e * s
    else:
        # Large C: loop over channels with O(R*128) carries (no (C,R,128) f32 temps).
        m = lax.fori_loop(1, C, lambda ci, m: jnp.maximum(m, chan(ci)), chan(0))

        def body(ci, zw):
            z, w = zw
            s = chan(ci) - m
            e = jnp.exp(s)
            return z + e, w + e * s

        z, w = lax.fori_loop(0, C, body, (jnp.zeros_like(m), jnp.zeros_like(m)))

    # 1/z: approx EUP reciprocal + one Newton step (rel err ~1e-7, well under 1e-5 tol).
    inv_z = pl.reciprocal(z, approx=True)
    inv_z = inv_z * (2.0 - z * inv_z)
    # sum_c softmax_c == 1  =>  entropy = log(z) - (sum_c e_c * s_c) / z
    return jnp.log(z) - w * inv_z


def _hloss_aligned_kernel(x_ref, out_ref, *, C, R, HW, unroll, needs_mask):
    """x_ref block: (Bb, C, R, 128); out_ref block: (1, 1, 1, 128) per-block partials."""
    ent = _entropy_tile(x_ref, C, unroll)                          # (Bb, 1, R, 128)

    def partial_sum(e):
        return jnp.sum(e, axis=(0, 1, 2)).reshape(1, 128)          # lane-dense partial

    if needs_mask:
        r_blk = pl.program_id(1)
        last = r_blk == pl.num_programs(1) - 1

        @pl.when(last)
        def _():
            # Only the last row-block can contain OOB garbage rows; mask them here.
            rows = lax.broadcasted_iota(jnp.int32, ent.shape, 2)
            lanes = lax.broadcasted_iota(jnp.int32, ent.shape, 3)
            pos = (r_blk * R + rows) * 128 + lanes                 # global spatial index
            out_ref[0, 0] = partial_sum(jnp.where(pos < HW, ent, 0.0))

        @pl.when(jnp.logical_not(last))
        def _():
            out_ref[0, 0] = partial_sum(ent)
    else:
        out_ref[0, 0] = partial_sum(ent)


def _hloss_unaligned_kernel(x_ref, out_ref, *, L, HW):
    """x_ref block: (Bb, C, L) with L % 128 == 0; out_ref block: (1, 1, 1, 128)."""
    x = x_ref[...].astype(jnp.float32)                             # (Bb, C, L)
    m = jnp.max(x, axis=1, keepdims=True)                          # (Bb, 1, L)
    s = x - m
    e = jnp.exp(s)
    z = jnp.sum(e, axis=1, keepdims=True)
    w = jnp.sum(e * s, axis=1, keepdims=True)
    inv_z = pl.reciprocal(z, approx=True)
    inv_z = inv_z * (2.0 - z * inv_z)
    ent = jnp.log(z) - w * inv_z                                   # (Bb, 1, L)

    s_blk = pl.program_id(1)
    last = s_blk == pl.num_programs(1) - 1
    lanes128 = lax.broadcasted_iota(jnp.int32, (1, 128), 1)

    def write(total):
        # Store the per-block scalar into lane 0 of a lane-dense (1, 128) output tile.
        out_ref[0, 0] = jnp.where(lanes128 == 0, total, 0.0)

    @pl.when(last)
    def _():
        idx = lax.broadcasted_iota(jnp.int32, ent.shape, 2)
        pos = s_blk * L + idx                                      # global spatial index
        write(jnp.sum(jnp.where(pos < HW, ent, 0.0)))

    @pl.when(jnp.logical_not(last))
    def _():
        write(jnp.sum(ent))


def _largest_divisor_leq(n, k):
    best = 1
    for d in range(1, n + 1):
        if n % d == 0 and d <= k:
            best = d
    return best


def hloss(x, *, target_vmem_bytes=36 * 1024 * 1024, block_rows=None, block_batch=None):
    """Entropy loss: mean over all non-channel positions of softmax(dim=1) entropy."""
    B, C = int(x.shape[0]), int(x.shape[1])
    HW = 1
    for d in x.shape[2:]:
        HW *= int(d)
    N = B * HW

    itemsize = jnp.dtype(x.dtype).itemsize
    sublane = {4: 8, 2: 16, 1: 32}.get(itemsize, 8)                # dtype-aware packing
    vmem_limit = 48 * 1024 * 1024                                  # v7x-safe (64 MiB phys)

    x3 = x.reshape(B, C, HW)                                       # free reshape
    unroll = C <= 16

    if HW % 128 == 0:
        # ---- fast path: (B, C, P, 128) blocking, per-channel dense (R, 128) math ----
        P = HW // 128
        # VMEM model per input element: double-buffered input + ~8 per-position f32 temps.
        bytes_per_elem = 2 * itemsize + 8.0 * 4.0 / C
        max_elems = max(int(target_vmem_bytes / bytes_per_elem), C * 128 * sublane)
        row_elems = C * P * 128

        if block_rows is not None:
            R = int(block_rows)
            if R != P and R % 8 != 0:
                raise ValueError("block_rows must be a multiple of 8 or equal to P")
        elif row_elems <= max_elems:
            R = P
        else:
            R = max(sublane, (max_elems // (C * 128)) // sublane * sublane)
        R = min(R, P)
        G_r = pl.cdiv(P, R)

        if block_batch is not None:
            Bb = int(block_batch)
            if B % Bb != 0:
                raise ValueError("block_batch must divide the batch size")
        elif R == P:
            # Whole rows fit: pack several batch elements per block (bigger DMAs).
            Bb = _largest_divisor_leq(B, max(1, max_elems // max(row_elems, 1)))
            if Bb == B and B > 1 and G_r == 1:
                # Keep >= 2 grid steps so both v7x TensorCores get work.
                for d in range(B - 1, 0, -1):
                    if B % d == 0:
                        Bb = d
                        break
        else:
            Bb = 1
        G_b = B // Bb
        needs_mask = (P % R != 0)

        kernel = functools.partial(_hloss_aligned_kernel, C=C, R=R, HW=HW,
                                   unroll=unroll, needs_mask=needs_mask)
        x4 = x3.reshape(B, C, P, 128)                              # free reshape
        partials = pl.pallas_call(
            kernel,
            out_shape=jax.ShapeDtypeStruct((G_b, G_r, 1, 128), jnp.float32),
            grid=(G_b, G_r),
            in_specs=[pl.BlockSpec((Bb, C, R, 128), lambda b, r: (b, 0, r, 0))],
            out_specs=pl.BlockSpec((1, 1, 1, 128), lambda b, r: (b, r, 0, 0)),
            compiler_params=pltpu.CompilerParams(
                dimension_semantics=("parallel", "parallel"),
                vmem_limit_bytes=vmem_limit,
            ),
        )(x4)
    else:
        # ---- unaligned path: block the (B, C, HW) view directly; no pad pass in HBM ----
        HW_pad = pl.cdiv(HW, 128) * 128
        # VMEM model: double-buffered input + ~4 channel-sized f32 temps + per-position.
        bytes_per_elem = 2 * itemsize + 4 * 4 + 8.0 * 4.0 / C
        max_elems = max(int(target_vmem_bytes / bytes_per_elem), C * 128)
        row_elems = C * HW_pad

        if row_elems <= max_elems:
            L = HW_pad
            Bb = _largest_divisor_leq(B, max(1, max_elems // max(row_elems, 1)))
            if Bb == B and B > 1:
                for d in range(B - 1, 0, -1):                      # >= 2 grid steps
                    if B % d == 0:
                        Bb = d
                        break
        else:
            Bb = 1
            L = min(HW_pad, max(128, (max_elems // C) // 128 * 128))
        if block_batch is not None:
            Bb = int(block_batch)
            if B % Bb != 0:
                raise ValueError("block_batch must divide the batch size")
        G_b = B // Bb
        G_s = pl.cdiv(HW, L)

        kernel = functools.partial(_hloss_unaligned_kernel, L=L, HW=HW)
        partials = pl.pallas_call(
            kernel,
            out_shape=jax.ShapeDtypeStruct((G_b, G_s, 1, 128), jnp.float32),
            grid=(G_b, G_s),
            in_specs=[pl.BlockSpec((Bb, C, L), lambda b, s: (b, 0, s))],
            out_specs=pl.BlockSpec((1, 1, 1, 128), lambda b, s: (b, s, 0, 0)),
            compiler_params=pltpu.CompilerParams(
                dimension_semantics=("parallel", "parallel"),
                vmem_limit_bytes=vmem_limit,
            ),
        )(x3)

    return jnp.sum(partials) / jnp.float32(N)


def hloss_ref(x):
    # Pure-JAX reference matching the PyTorch module.
    p = jax.nn.softmax(x, axis=1)
    logp = jax.nn.log_softmax(x, axis=1)
    return jnp.mean(jnp.sum(-p * logp, axis=1))


if __name__ == "__main__":
    results = []

    # 1) NCHW logits, 128-aligned spatial (fast 4-D path, unrolled channels).
    x1 = jax.random.normal(jax.random.PRNGKey(0), (2, 4, 16, 16), dtype=jnp.float32) * 3.0
    results.append((hloss(x1), hloss_ref(x1), 1e-5))

    # 2) Unaligned spatial size (HW = 100): no pad pass, partial-block + mask path.
    x2 = jax.random.normal(jax.random.PRNGKey(1), (2, 4, 10, 10), dtype=jnp.float32) * 3.0
    results.append((hloss(x2), hloss_ref(x2), 1e-5))

    # 3) Aligned but ragged row blocking (P % R != 0): exercises the last-block mask.
    x3 = jax.random.normal(jax.random.PRNGKey(2), (2, 4, 24, 64), dtype=jnp.float32) * 3.0
    results.append((hloss(x3, block_rows=8, block_batch=1), hloss_ref(x3), 1e-5))

    # 4) bf16 input (dtype-aware block sizing, in-kernel f32 math).
    x4 = (jax.random.normal(jax.random.PRNGKey(3), (2, 4, 16, 16), dtype=jnp.float32) * 3.0
          ).astype(jnp.bfloat16)
    results.append((hloss(x4), hloss_ref(x4.astype(jnp.float32)), 1e-4))

    # 5) Larger channel count -> fori_loop channel-reduction path.
    x5 = jax.random.normal(jax.random.PRNGKey(4), (2, 24, 16, 16), dtype=jnp.float32) * 2.0
    results.append((hloss(x5), hloss_ref(x5), 1e-5))

    for out, ref, tol in results:
        out = jax.block_until_ready(out)
        assert jnp.allclose(out, ref, rtol=tol, atol=tol), (out, ref)

    print("KERNEL_OK")
</pallas_src>

<mosaic_0001>
module attributes {stable_mosaic.version = 11 : i64} {
  func.func @_hloss_aligned_kernel(%arg0: i32, %arg1: i32, %arg2: memref<1x4x2x128xf32, #tpu.memory_space<vmem>>, %arg3: memref<1x1x1x128xf32, #tpu.memory_space<vmem>>) attributes {dimension_semantics = [#tpu.dimension_semantics<parallel>, #tpu.dimension_semantics<parallel>], iteration_bounds = array<i64: 2, 1>, scalar_prefetch = 0 : i64, scratch_operands = 0 : i64, tpu.core_type = #tpu.core_type<tc>, window_params = [{transform_indices = @transform_0, window_bounds = array<i64: 1, 4, 2, 128>}, {transform_indices = @transform_1, window_bounds = array<i64: 1, 1, 1, 128>}]} {
    %c0 = arith.constant 0 : index
    %c0_0 = arith.constant 0 : index
    %c0_1 = arith.constant 0 : index
    %c0_2 = arith.constant 0 : index
    %0 = vector.load %arg2[%c0, %c0_0, %c0_1, %c0_2] : memref<1x4x2x128xf32, #tpu.memory_space<vmem>>, vector<1x1x2x128xf32>
    %c0_3 = arith.constant 0 : index
    %c1 = arith.constant 1 : index
    %c0_4 = arith.constant 0 : index
    %c0_5 = arith.constant 0 : index
    %1 = vector.load %arg2[%c0_3, %c1, %c0_4, %c0_5] : memref<1x4x2x128xf32, #tpu.memory_space<vmem>>, vector<1x1x2x128xf32>
    %2 = arith.maximumf %0, %1 : vector<1x1x2x128xf32>
    %c0_6 = arith.constant 0 : index
    %c2 = arith.constant 2 : index
    %c0_7 = arith.constant 0 : index
    %c0_8 = arith.constant 0 : index
    %3 = vector.load %arg2[%c0_6, %c2, %c0_7, %c0_8] : memref<1x4x2x128xf32, #tpu.memory_space<vmem>>, vector<1x1x2x128xf32>
    %4 = arith.maximumf %2, %3 : vector<1x1x2x128xf32>
    %c0_9 = arith.constant 0 : index
    %c3 = arith.constant 3 : index
    %c0_10 = arith.constant 0 : index
    %c0_11 = arith.constant 0 : index
    %5 = vector.load %arg2[%c0_9, %c3, %c0_10, %c0_11] : memref<1x4x2x128xf32, #tpu.memory_space<vmem>>, vector<1x1x2x128xf32>
    %6 = arith.maximumf %4, %5 : vector<1x1x2x128xf32>
    %cst = arith.constant 0.000000e+00 : f32
    %7 = vector.broadcast %cst : f32 to vector<1x1x2x128xf32>
    %cst_12 = arith.constant 0.000000e+00 : f32
    %8 = vector.broadcast %cst_12 : f32 to vector<1x1x2x128xf32>
    %c0_13 = arith.constant 0 : index
    %c0_14 = arith.constant 0 : index
    %c0_15 = arith.constant 0 : index
    %c0_16 = arith.constant 0 : index
    %9 = vector.load %arg2[%c0_13, %c0_14, %c0_15, %c0_16] : memref<1x4x2x128xf32, #tpu.memory_space<vmem>>, vector<1x1x2x128xf32>
    %10 = arith.subf %9, %6 : vector<1x1x2x128xf32>
    %11 = math.exp %10 : vector<1x1x2x128xf32>
    %12 = arith.addf %7, %11 : vector<1x1x2x128xf32>
    %13 = arith.mulf %11, %10 : vector<1x1x2x128xf32>
    %14 = arith.addf %8, %13 : vector<1x1x2x128xf32>
    %c0_17 = arith.constant 0 : index
    %c1_18 = arith.constant 1 : index
    %c0_19 = arith.constant 0 : index
    %c0_20 = arith.constant 0 : index
    %15 = vector.load %arg2[%c0_17, %c1_18, %c0_19, %c0_20] : memref<1x4x2x128xf32, #tpu.memory_space<vmem>>, vector<1x1x2x128xf32>
    %16 = arith.subf %15, %6 : vector<1x1x2x128xf32>
    %17 = math.exp %16 : vector<1x1x2x128xf32>
    %18 = arith.addf %12, %17 : vector<1x1x2x128xf32>
    %19 = arith.mulf %17, %16 : vector<1x1x2x128xf32>
    %20 = arith.addf %14, %19 : vector<1x1x2x128xf32>
    %c0_21 = arith.constant 0 : index
    %c2_22 = arith.constant 2 : index
    %c0_23 = arith.constant 0 : index
    %c0_24 = arith.constant 0 : index
    %21 = vector.load %arg2[%c0_21, %c2_22, %c0_23, %c0_24] : memref<1x4x2x128xf32, #tpu.memory_space<vmem>>, vector<1x1x2x128xf32>
    %22 = arith.subf %21, %6 : vector<1x1x2x128xf32>
    %23 = math.exp %22 : vector<1x1x2x128xf32>
    %24 = arith.addf %18, %23 : vector<1x1x2x128xf32>
    %25 = arith.mulf %23, %22 : vector<1x1x2x128xf32>
    %26 = arith.addf %20, %25 : vector<1x1x2x128xf32>
    %c0_25 = arith.constant 0 : index
    %c3_26 = arith.constant 3 : index
    %c0_27 = arith.constant 0 : index
    %c0_28 = arith.constant 0 : index
    %27 = vector.load %arg2[%c0_25, %c3_26, %c0_27, %c0_28] : memref<1x4x2x128xf32, #tpu.memory_space<vmem>>, vector<1x1x2x128xf32>
    %28 = arith.subf %27, %6 : vector<1x1x2x128xf32>
    %29 = math.exp %28 : vector<1x1x2x128xf32>
    %30 = arith.addf %24, %29 : vector<1x1x2x128xf32>
    %31 = arith.mulf %29, %28 : vector<1x1x2x128xf32>
    %32 = arith.addf %26, %31 : vector<1x1x2x128xf32>
    %33 = tpu.reciprocal %30 {approx = true} : vector<1x1x2x128xf32> -> vector<1x1x2x128xf32>
    %34 = arith.mulf %30, %33 : vector<1x1x2x128xf32>
    %cst_29 = arith.constant 2.000000e+00 : f32
    %35 = vector.broadcast %cst_29 : f32 to vector<1x1x2x128xf32>
    %36 = arith.subf %35, %34 : vector<1x1x2x128xf32>
    %37 = arith.mulf %33, %36 : vector<1x1x2x128xf32>
    %38 = math.log %30 : vector<1x1x2x128xf32>
    %39 = arith.mulf %32, %37 : vector<1x1x2x128xf32>
    %40 = arith.subf %38, %39 : vector<1x1x2x128xf32>
    %cst_30 = arith.constant dense<0.000000e+00> : vector<128xf32>
    %41 = vector.multi_reduction <add>, %40, %cst_30 [0, 1, 2] : vector<1x1x2x128xf32> to vector<128xf32>
    %42 = vector.shape_cast %41 : vector<128xf32> to vector<1x128xf32>
    %c0_31 = arith.constant 0 : index
    %c0_32 = arith.constant 0 : index
    %c0_33 = arith.constant 0 : index
    %c0_34 = arith.constant 0 : index
    %43 = vector.load %arg3[%c0_31, %c0_32, %c0_33, %c0_34] : memref<1x1x1x128xf32, #tpu.memory_space<vmem>>, vector<1x1x1x128xf32>
    %44 = vector.shape_cast %43 : vector<1x1x1x128xf32> to vector<1x128xf32>
    %45 = vector.shape_cast %42 : vector<1x128xf32> to vector<1x1x1x128xf32>
    tpu.vector_store %arg3[%c0_31, %c0_32, %c0_33, %c0_34], %45 {strides = array<i32>} : memref<1x1x1x128xf32, #tpu.memory_space<vmem>>, vector<1x1x1x128xf32>,
    return
  }
  func.func @transform_0(%arg0: i32, %arg1: i32) -> (i32, i32, i32, i32) {
    %c0_i32 = arith.constant 0 : i32
    %c0_i32_0 = arith.constant 0 : i32
    %c0_i32_1 = arith.constant 0 : i32
    return %arg0, %c0_i32, %arg1, %c0_i32_0 : i32, i32, i32, i32
  }
  func.func @transform_1(%arg0: i32, %arg1: i32) -> (i32, i32, i32, i32) {
    %c0_i32 = arith.constant 0 : i32
    %c0_i32_0 = arith.constant 0 : i32
    %c0_i32_1 = arith.constant 0 : i32
    return %arg0, %arg1, %c0_i32, %c0_i32_0 : i32, i32, i32, i32
  }
}

</mosaic_0001>

<llo_original>
// kernel: tpu_custom_call.1
$region0: #{tpu_custom_call.1}
  #allocation0 [shape = 'u32[]', space=smem, size = 0x4, offset = 0x4, fixed_abs, tag = 'smem constant byte address 0x4 - core index']
  #allocation1 [shape = 'u32[144,128]{1,0:T(1,128)}', space=vmem, size = 0x12000, scoped, tag = 'internal scratch']
  %s0 = inlined_call_operand.hbm [shape: f32[2,4,2,128], index: 0, kind: input, shape index: {}]
  %s1 = inlined_call_operand.hbm [shape: f32[2,1,1,128], index: 1, kind: output, shape index: {}]
  %s2 = sld [smem:[#allocation0]]
  $region41: #{tpu_custom_call.1} parent=0
    _
  %s4 = ssub.s32 1, %s2
  %s5 = scalar_select 0, %s4, %s2
  $region1: #{tpu_custom_call.1} parent=0
    #allocation2 [shape = 'u8[8192]{0}', space=vmem, size = 0x2000, scoped, tag = 'input window, operand 0']
    #allocation3 [shape = 's32[2]{0}', space=sflag, size = 0x8, scoped, tag = 'scoped memory for tpu_custom_call.1']
    #allocation4 [shape = 's32[2]{0}', space=sflag, size = 0x8, scoped, tag = 'scoped memory for tpu_custom_call.1']
    #allocation5 [shape = 'u8[1024]{0}', space=vmem, size = 0x400, scoped, tag = 'output window, operand 0']
    %6 = vsyncpa [#allocation3], 0
    %s7 = scalar_lea.sflag [#allocation3], 1
    %8 = vsyncpa %s7, 0
    %9 = vsyncpa [#allocation4], 0
    %s10 = scalar_lea.sflag [#allocation4], 1
    %11 = vsyncpa %s10, 0
    loop: start=0, step=1, limit=4
    $region2: #{tpu_custom_call.1} parent=1 // loop_pre_header
      _
    $region3: #{tpu_custom_call.1} parent=1 // loop_header
      %s13 = sphi 0, %s17
      %p14 = scmp.ge.s32.totalorder %s13, 4
      %s20 = sphi 0, %s32
      %s21 = sphi 0, %s28
      %s22 = sphi 0, %s20
      %s23 = sphi 0, %s21
      %s24 = sphi 0, %s22
      %s25 = sphi 0, %s23
      %s37 = sphi 0, %s39
      %s40 = sphi 0, %s37
      %s41 = sphi 0, %s40
      %s57 = sphi 0, %s41
      %s65 = sphi 0, %s67
      %s68 = sphi 0, %s65
      %s69 = sphi 0, %s68
      %s85 = sphi 0, %s69
    $region4: #{tpu_custom_call.1} parent=1 // loop_header_branch
      %16 = sbr.rel (%p14) target = $region8
    $region5: #{tpu_custom_call.1} parent=1 // loop_body
      %s18 = ssub.s32 %s13, 1
      %s19 = ssub.s32 %s13, 2
      %s26 = sadd.s32 1, %s21
      %p27 = scmp.ge.s32.totalorder %s26, 1
      %s28 = scalar_select %p27, 0, %s26
      %s29 = sadd.s32 1, %s20
      %s30 = scalar_select %p27, %s29, %s20
      %p31 = scmp.ge.s32.totalorder %s30, 2
      %s32 = scalar_select %p31, 0, %s30
      %s33 = ssub.s32 %s20, %s32
      %s34 = ssub.s32 %s21, %s28
      %s35 = sor.u32 %s33, %s34
      %p36 = scmp.eq.s32.totalorder %s35, 0
      %s38 = sadd.s32 %s37, 1
      %s39 = scalar_select %p36, %s37, %s38
      %p42 = pneg %p36
      %p43 = scmp.eq.s32.totalorder %s13, 1
      %p44 = por %p42, %p43
      %p45 = scmp.ne.s32.totalorder %s37, %s40
      %p46 = scmp.eq.s32.totalorder %s13, 0
      %p47 = por %p45, %p46
      %p48 = scmp.ne.s32.totalorder %s37, %s40
      %p49 = scmp.eq.s32.totalorder %s18, 1
      %p50 = por %p48, %p49
      %p51 = scmp.ne.s32.totalorder %s40, %s41
      %p52 = scmp.eq.s32.totalorder %s18, 0
      %p53 = por %p51, %p52
      %p54 = scmp.ne.s32.totalorder %s40, %s41
      %p55 = scmp.eq.s32.totalorder %s19, 1
      %p56 = por %p54, %p55
      %p58 = scmp.ne.s32.totalorder %s41, %s57
      %p59 = scmp.eq.s32.totalorder %s19, 0
      %p60 = por %p58, %p59
      %s61 = ssub.s32 %s20, %s32
      %s62 = ssub.s32 %s21, %s28
      %s63 = sor.u32 %s61, %s62
      %p64 = scmp.eq.s32.totalorder %s63, 0
      %s66 = sadd.s32 %s65, 1
      %s67 = scalar_select %p64, %s65, %s66
      %p70 = pneg %p64
      %p71 = scmp.eq.s32.totalorder %s13, 1
      %p72 = por %p70, %p71
      %p73 = scmp.ne.s32.totalorder %s65, %s68
      %p74 = scmp.eq.s32.totalorder %s13, 0
      %p75 = por %p73, %p74
      %p76 = scmp.ne.s32.totalorder %s65, %s68
      %p77 = scmp.eq.s32.totalorder %s18, 1
      %p78 = por %p76, %p77
      %p79 = scmp.ne.s32.totalorder %s68, %s69
      %p80 = scmp.eq.s32.totalorder %s18, 0
      %p81 = por %p79, %p80
      %p82 = scmp.ne.s32.totalorder %s68, %s69
      %p83 = scmp.eq.s32.totalorder %s19, 1
      %p84 = por %p82, %p83
      %p86 = scmp.ne.s32.totalorder %s69, %s85
      %p87 = scmp.eq.s32.totalorder %s19, 0
      %p88 = por %p86, %p87
      %p89 = scmp.le.s32.totalorder 1, %s13
      %p90 = scmp.lt.s32.totalorder %s13, 3
      %p91 = pnand %p89, %p90
      %p92 = pneg %p91
      // Predicated region
      $region9: #{tpu_custom_call.1} parent=5 // pred_check
        _
      $region10: #{tpu_custom_call.1} parent=5 // pred_check_branch
        %94 = sbr.rel (%p91) target = $region12
      $region11: #{tpu_custom_call.1} parent=5 // pred_region
        %s95 = ssub.s32 %s13, 1
      $region12: #{tpu_custom_call.1} parent=5 // pred_fallthru
        _
      %p96 = scmp.lt.s32.totalorder %s13, 2
      // Predicated region
      $region13: #{tpu_custom_call.1} parent=5 // pred_check
        %p97 = pneg %p96
      $region14: #{tpu_custom_call.1} parent=5 // pred_check_branch
        %99 = sbr.rel (%p97) target = $region16
      $region15: #{tpu_custom_call.1} parent=5 // pred_region
        // Predicated region
        $region17: #{tpu_custom_call.1} parent=15 // pred_check
          %p100 = pneg %p47
        $region18: #{tpu_custom_call.1} parent=15 // pred_check_branch
          %102 = sbr.rel (%p100) target = $region20
        $region19: #{tpu_custom_call.1} parent=15 // pred_region
          %s103 = sand.u32 %s37, 1
          %s104 = scalar_lea.sflag [#allocation3], %s103
          %s105 = sand.u32 %s37, 1
          %s106 = smul.addr %s105, 8
          %s107 = scalar_lea.vmem [#allocation2], %s106
          %s109 = ssub.s32 128, 128
          %110 = vsyncadd %s104, %s109
          %s111 = smul.addr %s20, 4
          %s112 = sadd.s32 %s21, %s111
          %s113 = smul.addr %s112, 32
          %s114 = scalar_lea.hbm %s0, %s113
          %s115 = sshll.u32 %s107, 4
          %s116 = int_to_ptr.vmem [resolvable:$true] %s115
          %121 = dma.hbm_to_vmem [thread:$0]  %s114, 128, %s116, %s104, 32, 32, 2
        $region20: #{tpu_custom_call.1} parent=15 // pred_fallthru
          _
      $region16: #{tpu_custom_call.1} parent=5 // pred_fallthru
        _
      %p122 = scmp.le.s32.totalorder 1, %s13
      %p123 = scmp.lt.s32.totalorder %s13, 3
      %p124 = pnand %p122, %p123
      %p125 = pneg %p124
      // Predicated region
      $region21: #{tpu_custom_call.1} parent=5 // pred_check
        _
      $region22: #{tpu_custom_call.1} parent=5 // pred_check_branch
        %127 = sbr.rel (%p124) target = $region24
      $region23: #{tpu_custom_call.1} parent=5 // pred_region
        %s128 = ssub.s32 %s13, 1
        %s129 = sand.u32 %s40, 1
        %s130 = scalar_lea.sflag [#allocation3], %s129
        %s131 = sand.u32 %s40, 1
        %s132 = smul.addr %s131, 8
        %s133 = scalar_lea.vmem [#allocation2], %s132
        // Predicated region
        $region25: #{tpu_custom_call.1} parent=23 // pred_check
          %p134 = pneg %p53
        $region26: #{tpu_custom_call.1} parent=23 // pred_check_branch
          %136 = sbr.rel (%p134) target = $region28
        $region27: #{tpu_custom_call.1} parent=23 // pred_region
          %137 = dma.done %s130, 128
        $region28: #{tpu_custom_call.1} parent=23 // pred_fallthru
          _
        %s138 = sand.u32 %s40, 1
        %s139 = scalar_lea.sflag [#allocation3], %s138
        %s140 = sand.u32 %s40, 1
        %s141 = smul.addr %s140, 8
        %s142 = scalar_lea.vmem [#allocation2], %s141
        %p143 = pneg %p53
        %p144 = pneg %p50
        %p145 = pneg %p81
        %p146 = pneg %p78
        %s147 = sand.u32 %s68, 1
        %s148 = scalar_lea.sflag [#allocation4], %s147
        %s149 = sand.u32 %s68, 1
        %s150 = scalar_lea.vmem [#allocation5], %s149
        %v151 = vld [vmem:[%s133] sm:$0x3]
        %s152 = scalar_lea.vmem %s133, 2 [#allocation2]
        %v153 = vld [vmem:[%s152] sm:$0x3]
        %v154 = vmax.f32 %v151, %v153
        %s155 = scalar_lea.vmem %s133, 4 [#allocation2]
        %v156 = vld [vmem:[%s155] sm:$0x3]
        %v157 = vmax.f32 %v154, %v156
        %s158 = scalar_lea.vmem %s133, 6 [#allocation2]
        %v159 = vld [vmem:[%s158] sm:$0x3]
        %v160 = vmax.f32 %v157, %v159
        %v161 = vsub.f32 %v151, %v160
        %v162 = vmul.f32 %v161, 1.442695
        %v163 = vpow.pop %v162
        %v164 = vadd.f32 %v163, 0.0
        %v165 = vmul.f32 %v163, %v161
        %v166 = vadd.f32 %v165, 0.0
        %v167 = vsub.f32 %v153, %v160
        %v168 = vmul.f32 %v167, 1.442695
        %v169 = vpow.pop %v168
        %v170 = vadd.f32 %v164, %v169
        %v171 = vmul.f32 %v169, %v167
        %v172 = vadd.f32 %v166, %v171
        %v173 = vsub.f32 %v156, %v160
        %v174 = vmul.f32 %v173, 1.442695
        %v175 = vpow.pop %v174
        %v176 = vadd.f32 %v170, %v175
        %v177 = vmul.f32 %v175, %v173
        %v178 = vadd.f32 %v172, %v177
        %v179 = vsub.f32 %v159, %v160
        %v180 = vmul.f32 %v179, 1.442695
        %v181 = vpow.pop %v180
        %v182 = vadd.f32 %v176, %v181
        %v183 = vmul.f32 %v181, %v179
        %v184 = vadd.f32 %v178, %v183
        %v185 = vrcp.pop %v182
        %v186 = vmul.f32 %v182, %v185
        %v187 = vsub.f32 2.0, %v186
        %v188 = vmul.f32 %v185, %v187
        %v189 = vlog2.pop %v182
        %v190 = vmul.f32 %v189, 0.6931472
        %v191 = vmul.f32 %v184, %v188
        %v192 = vsub.f32 %v190, %v191
        %vm193 = vcmask 1041408
        %v194 = vsel %vm193, %v192, 0.0
        %v195 = vrot.slane %v194, 4
        %v196 = vadd.f32 %v194, %v195
        %v197 = vrot.slane %v196, 2
        %v198 = vadd.f32 %v196, %v197
        %v199 = vrot.slane %v198, 1
        %v200 = vadd.f32 %v198, %v199
        %201 = vst [vmem:[%s150] sm:$0x1] %v200
        %s202 = sand.u32 %s68, 1
        %s203 = scalar_lea.sflag [#allocation4], %s202
        %s204 = sand.u32 %s68, 1
        %s205 = scalar_lea.vmem [#allocation5], %s204
        // Predicated region
        $region29: #{tpu_custom_call.1} parent=23 // pred_check
          %p206 = pneg %p78
        $region30: #{tpu_custom_call.1} parent=23 // pred_check_branch
          %208 = sbr.rel (%p206) target = $region32
        $region31: #{tpu_custom_call.1} parent=23 // pred_region
          %s210 = ssub.s32 16, 16
          %211 = vsyncadd %s203, %s210
          %s212 = sadd.s32 %s23, %s22
          %s213 = smul.addr %s212, 16
          %s214 = scalar_lea.hbm %s1, %s213
          %s216 = sshll.u32 %s205, 4
          %s217 = int_to_ptr.vmem [resolvable:$true] %s216
          %219 = dma.vmem_to_hbm [thread:$0]  %s217, 16, %s214, %s203
        $region32: #{tpu_custom_call.1} parent=23 // pred_fallthru
          _
      $region24: #{tpu_custom_call.1} parent=5 // pred_fallthru
        _
      %p220 = scmp.le.s32.totalorder 2, %s13
      // Predicated region
      $region33: #{tpu_custom_call.1} parent=5 // pred_check
        %p221 = pneg %p220
      $region34: #{tpu_custom_call.1} parent=5 // pred_check_branch
        %223 = sbr.rel (%p221) target = $region36
      $region35: #{tpu_custom_call.1} parent=5 // pred_region
        %s224 = ssub.s32 %s13, 2
        // Predicated region
        $region37: #{tpu_custom_call.1} parent=35 // pred_check
          %p225 = pneg %p84
        $region38: #{tpu_custom_call.1} parent=35 // pred_check_branch
          %227 = sbr.rel (%p225) target = $region40
        $region39: #{tpu_custom_call.1} parent=35 // pred_region
          %s228 = sand.u32 %s69, 1
          %s229 = scalar_lea.sflag [#allocation4], %s228
          %s230 = sand.u32 %s69, 1
          %s231 = scalar_lea.vmem [#allocation5], %s230
          %232 = dma.done %s229, 16
        $region40: #{tpu_custom_call.1} parent=35 // pred_fallthru
          _
      $region36: #{tpu_custom_call.1} parent=5 // pred_fallthru
        _
    $region6: #{tpu_custom_call.1} parent=1 // loop_footer
      %s17 = sadd.s32 1, %s13
    $region7: #{tpu_custom_call.1} parent=1 // loop_footer_branch
      %12 = sbr.rel target = $region3
    $region8: #{tpu_custom_call.1} parent=1 // loop_exit
      _
    %233 = vsyncpa [#allocation3], 1
    %s234 = scalar_lea.sflag [#allocation3], 1
    %235 = vsyncpa %s234, 1
    %236 = vsyncpa [#allocation4], 1
    %s237 = scalar_lea.sflag [#allocation4], 1
    %238 = vsyncpa %s237, 1

</llo_original>
